<compile_context>
chip_gen: v7x
topology: tpu7x:2x2x1
jax: 0.10.0
libtpu: 0.0.40
codegen_flags: <defaults>
</compile_context>

<pallas_src>
import jax
import jax.numpy as jnp
from jax.experimental import pallas as pl
from jax.experimental.pallas import tpu as pltpu


def context_vector_kernel(attn_ref, lstm_ref, out_ref, acc_ref):
    """One (batch-tile, H-tile, S-chunk) grid step.

    attn_ref: (BT, ST)       lane-dense attention weights
    lstm_ref: (BT, ST, HT)   lstm outputs for this tile
    out_ref : (BT, HT)       output tile (written on the last S chunk)
    acc_ref : (BT, HT) f32   VMEM accumulator, carried across the S axis
    """
    si = pl.program_id(2)

    @pl.when(si == 0)
    def _():
        acc_ref[...] = jnp.zeros_like(acc_ref)

    # HBM-bound kernel: VPU multiply + cross-sublane reduce (f32 accumulation)
    # is fully hidden behind the lstm-block DMA.
    w = attn_ref[...].astype(jnp.float32)          # (BT, ST)
    x = lstm_ref[...].astype(jnp.float32)          # (BT, ST, HT)
    acc_ref[...] += jnp.sum(x * w[:, :, None], axis=1)

    @pl.when(si == pl.num_programs(2) - 1)
    def _():
        out_ref[...] = acc_ref[...].astype(out_ref.dtype)


def _vmem_config():
    """Return (vmem_limit_bytes, lstm_budget_bytes, per_step_target_bytes)."""
    phys = None
    try:
        info = pltpu.get_tpu_info()
        for name in ("vmem_capacity_bytes", "vmem_size_bytes", "vmem_bytes"):
            phys = getattr(info, name, None)
            if phys:
                break
    except Exception:
        phys = None
    if not phys:
        try:
            kind = jax.devices()[0].device_kind.lower()
        except Exception:
            kind = ""
        # Assume the smallest (v7x-class, 64 MiB) VMEM when unsure.
        phys = 128 * 1024 * 1024 if ("v5" in kind or "v6" in kind) else 64 * 1024 * 1024

    if phys >= 128 * 1024 * 1024:
        # v5e / v6e: 128 MiB physical VMEM -> raise the scoped limit, big tiles.
        return 100 * 1024 * 1024, 80 * 1024 * 1024, 8 * 1024 * 1024
    # v7x-class: 64 MiB physical VMEM per TensorCore -> smaller budget/tiles.
    return 48 * 1024 * 1024, 40 * 1024 * 1024, 4 * 1024 * 1024


def _tile_config(B, S, H, itemsize, lstm_budget, step_target):
    """Pick (BT, ST, HT).

    Legality: each of the trailing two dims of every block is either a multiple
    of its native tile (sublane 8/16/32 by dtype, lane 128) or equals the full
    array dim.
    """
    sub = {4: 8, 2: 16, 1: 32}.get(itemsize, 8)
    # Conservative VMEM bytes/element on the lstm path: double-buffered input
    # block plus the in-kernel f32 upcast / broadcast / product temporaries.
    per_elem = 2 * itemsize + 12

    bt_max = B if B < sub else (B // sub) * sub
    ht_cands = [H] + [c for c in (2048, 1024, 512, 256, 128) if c < H and H % c == 0]

    def pick_bt(ht):
        bt = bt_max if B < sub else sub
        s_min = min(S, 128)
        if B >= sub:
            # Grow BT while a minimal S chunk keeps the per-step lstm block
            # under the per-generation target and the VMEM budget.
            while (bt * 2 <= bt_max
                   and (bt * 2) * s_min * ht * itemsize <= step_target
                   and (bt * 2) * s_min * ht * per_elem <= lstm_budget):
                bt *= 2
        return bt

    def pick_st(bt, ht):
        # Keep all of S (single reduction step, fully contiguous rows) if it
        # fits; otherwise split S into lane-aligned chunks that divide S.
        if (bt * S * ht * per_elem <= lstm_budget
                and bt * S * ht * itemsize <= 2 * step_target):
            return S
        st_cap = min(S,
                     lstm_budget // (bt * ht * per_elem),
                     step_target // (bt * ht * itemsize))
        st_cap = (st_cap // 128) * 128
        for d in range(st_cap, 127, -128):
            if S % d == 0:
                return d
        if bt * S * ht * per_elem <= lstm_budget:
            return S
        return None

    chosen = None
    for ht in ht_cands:
        bt = pick_bt(ht)
        while True:
            st = pick_st(bt, ht)
            if st is not None:
                chosen = (bt, st, ht)
                break
            if B < sub or bt <= sub:
                break
            bt //= 2
        if chosen is not None:
            break

    if chosen is None:
        # TODO(synk): pathological shapes (huge S with no multiple-of-128
        # divisor and no lane-aligned H divisor) may still exceed the VMEM
        # limit; zero-padding S (exact, since padded weights are 0) would cover
        # them at the cost of one extra HBM copy.
        chosen = (bt_max if B < sub else sub, S, ht_cands[-1])

    bt, st, ht = chosen
    # v7x megacore: if both parallel grid axes collapsed to one step, split H
    # into >= 2 tiles so the second TensorCore gets work (harmless on 1-TC
    # v5e/v6e).
    if pl.cdiv(B, bt) == 1 and pl.cdiv(H, ht) == 1 and H >= 256 and H % 128 == 0:
        ht2 = next((c for c in (2048, 1024, 512, 256, 128)
                    if c <= H // 2 and H % c == 0), None)
        if ht2 is not None:
            st2 = pick_st(bt, ht2)
            if st2 is not None:
                st, ht = st2, ht2
    return bt, st, ht


def context_vector(lstm_output, attention_weights):
    """JAX/Pallas equivalent of torch.sum(lstm_output * attention_weights, dim=1)."""
    B, S, H = lstm_output.shape

    # (B, S, 1) -> (B, S): drop the broadcast dim so the attention tile is
    # lane-dense over S instead of lane-padded 128x.
    if attention_weights.ndim == 3:
        assert attention_weights.shape == (B, S, 1)
        attn = jnp.squeeze(attention_weights, axis=-1)
    else:
        assert attention_weights.shape == (B, S)
        attn = attention_weights

    itemsize = jnp.dtype(lstm_output.dtype).itemsize
    vmem_limit, lstm_budget, step_target = _vmem_config()
    BT, ST, HT = _tile_config(B, S, H, itemsize, lstm_budget, step_target)

    grid = (pl.cdiv(B, BT), pl.cdiv(H, HT), pl.cdiv(S, ST))
    n_steps = grid[0] * grid[1] * grid[2]

    lstm_block = (BT, ST, HT)
    lstm_map = lambda bi, hi, si: (bi, si, hi)
    lstm_block_bytes = BT * ST * HT * itemsize
    if lstm_block_bytes < (1 << 20) and n_steps >= 3:
        # Tiny per-step blocks: DMA-latency (not bandwidth) limited -> keep a
        # third buffer in flight. Skipped for multi-MiB tiles to save VMEM.
        try:
            lstm_spec = pl.BlockSpec(lstm_block, lstm_map,
                                     pipeline_mode=pl.Buffered(3))
        except TypeError:  # older jax without pipeline_mode on BlockSpec
            lstm_spec = pl.BlockSpec(lstm_block, lstm_map)
    else:
        lstm_spec = pl.BlockSpec(lstm_block, lstm_map)

    out = pl.pallas_call(
        context_vector_kernel,
        out_shape=jax.ShapeDtypeStruct((B, H), lstm_output.dtype),
        grid_spec=pltpu.PrefetchScalarGridSpec(
            num_scalar_prefetch=0,
            grid=grid,
            in_specs=[
                pl.BlockSpec((BT, ST), lambda bi, hi, si: (bi, si)),
                lstm_spec,
            ],
            out_specs=pl.BlockSpec((BT, HT), lambda bi, hi, si: (bi, hi)),
            scratch_shapes=[pltpu.VMEM((BT, HT), jnp.float32)],
        ),
        compiler_params=pltpu.CompilerParams(
            dimension_semantics=("parallel", "parallel", "arbitrary"),
            vmem_limit_bytes=vmem_limit,
        ),
    )(attn, lstm_output)
    return out


def context_vector_ref(lstm_output, attention_weights):
    return jnp.sum(lstm_output * attention_weights, axis=1)


if __name__ == "__main__":
    B, S, H = 2, 8, 32
    key = jax.random.PRNGKey(0)
    k1, k2 = jax.random.split(key)

    lstm_output = jax.random.normal(k1, (B, S, H), dtype=jnp.float32)
    # softmax-normalized attention weights along the sequence axis, shape (B, S, 1)
    attn_logits = jax.random.normal(k2, (B, S), dtype=jnp.float32)
    attention_weights = jax.nn.softmax(attn_logits, axis=1)[..., None]

    out = context_vector(lstm_output, attention_weights)
    out = jax.block_until_ready(out)

    ref = context_vector_ref(lstm_output, attention_weights)
    assert out.shape == (B, H)
    assert jnp.allclose(out, ref, atol=1e-5, rtol=1e-5)

    print("KERNEL_OK")
</pallas_src>

<mosaic_0001>
module attributes {stable_mosaic.version = 11 : i64} {
  func.func @context_vector_kernel(%arg0: i32, %arg1: i32, %arg2: i32, %arg3: memref<2x8xf32, #tpu.memory_space<vmem>>, %arg4: memref<2x8x32xf32, #tpu.memory_space<vmem>>, %arg5: memref<2x32xf32, #tpu.memory_space<vmem>>, %arg6: memref<2x32xf32, #tpu.memory_space<vmem>>) attributes {dimension_semantics = [#tpu.dimension_semantics<parallel>, #tpu.dimension_semantics<parallel>, #tpu.dimension_semantics<arbitrary>], iteration_bounds = array<i64: 1, 1, 1>, scalar_prefetch = 0 : i64, scratch_operands = 1 : i64, tpu.core_type = #tpu.core_type<tc>, window_params = [{transform_indices = @transform_0, window_bounds = array<i64: 2, 8>}, {transform_indices = @transform_1, window_bounds = array<i64: 2, 8, 32>}, {transform_indices = @transform_2, window_bounds = array<i64: 2, 32>}]} {
    %c0_i32 = arith.constant 0 : i32
    %0 = arith.cmpi eq, %arg2, %c0_i32 : i32
    %1 = arith.extui %0 : i1 to i32
    %c0_i32_0 = arith.constant 0 : i32
    %2 = arith.cmpi ne, %1, %c0_i32_0 : i32
    scf.if %2 {
      %cst_11 = arith.constant 0.000000e+00 : f32
      %15 = vector.broadcast %cst_11 : f32 to vector<2x32xf32>
      %c0_12 = arith.constant 0 : index
      %c0_13 = arith.constant 0 : index
      %16 = vector.load %arg6[%c0_12, %c0_13] : memref<2x32xf32, #tpu.memory_space<vmem>>, vector<2x32xf32>
      tpu.vector_store %arg6[%c0_12, %c0_13], %15 {strides = array<i32>} : memref<2x32xf32, #tpu.memory_space<vmem>>, vector<2x32xf32>,
    } else {
    }
    %c0 = arith.constant 0 : index
    %c0_1 = arith.constant 0 : index
    %3 = vector.load %arg3[%c0, %c0_1] : memref<2x8xf32, #tpu.memory_space<vmem>>, vector<2x8xf32>
    %c0_2 = arith.constant 0 : index
    %c0_3 = arith.constant 0 : index
    %c0_4 = arith.constant 0 : index
    %4 = vector.load %arg4[%c0_2, %c0_3, %c0_4] : memref<2x8x32xf32, #tpu.memory_space<vmem>>, vector<2x8x32xf32>
    %c0_5 = arith.constant 0 : index
    %c0_6 = arith.constant 0 : index
    %5 = vector.load %arg6[%c0_5, %c0_6] : memref<2x32xf32, #tpu.memory_space<vmem>>, vector<2x32xf32>
    %6 = vector.shape_cast %3 : vector<2x8xf32> to vector<2x8x1xf32>
    %7 = vector.broadcast %6 : vector<2x8x1xf32> to vector<2x8x32xf32>
    %8 = arith.mulf %4, %7 : vector<2x8x32xf32>
    %cst = arith.constant dense<0.000000e+00> : vector<2x32xf32>
    %9 = vector.multi_reduction <add>, %8, %cst [1] : vector<2x8x32xf32> to vector<2x32xf32>
    %10 = arith.addf %5, %9 : vector<2x32xf32>
    %c0_7 = arith.constant 0 : index
    %c0_8 = arith.constant 0 : index
    %11 = vector.load %arg6[%c0_7, %c0_8] : memref<2x32xf32, #tpu.memory_space<vmem>>, vector<2x32xf32>
    tpu.vector_store %arg6[%c0_7, %c0_8], %10 {strides = array<i32>} : memref<2x32xf32, #tpu.memory_space<vmem>>, vector<2x32xf32>,
    %c0_i32_9 = arith.constant 0 : i32
    %12 = arith.cmpi eq, %arg2, %c0_i32_9 : i32
    %13 = arith.extui %12 : i1 to i32
    %c0_i32_10 = arith.constant 0 : i32
    %14 = arith.cmpi ne, %13, %c0_i32_10 : i32
    scf.if %14 {
      %c0_11 = arith.constant 0 : index
      %c0_12 = arith.constant 0 : index
      %15 = vector.load %arg6[%c0_11, %c0_12] : memref<2x32xf32, #tpu.memory_space<vmem>>, vector<2x32xf32>
      %c0_13 = arith.constant 0 : index
      %c0_14 = arith.constant 0 : index
      %16 = vector.load %arg5[%c0_13, %c0_14] : memref<2x32xf32, #tpu.memory_space<vmem>>, vector<2x32xf32>
      tpu.vector_store %arg5[%c0_13, %c0_14], %15 {strides = array<i32>} : memref<2x32xf32, #tpu.memory_space<vmem>>, vector<2x32xf32>,
    } else {
    }
    return
  }
  func.func @transform_0(%arg0: i32, %arg1: i32, %arg2: i32) -> (i32, i32) {
    %c0_i32 = arith.constant 0 : i32
    return %arg0, %arg2 : i32, i32
  }
  func.func @transform_1(%arg0: i32, %arg1: i32, %arg2: i32) -> (i32, i32, i32) {
    %c0_i32 = arith.constant 0 : i32
    return %arg0, %arg2, %arg1 : i32, i32, i32
  }
  func.func @transform_2(%arg0: i32, %arg1: i32, %arg2: i32) -> (i32, i32) {
    %c0_i32 = arith.constant 0 : i32
    return %arg0, %arg1 : i32, i32
  }
}

</mosaic_0001>

<llo_original>
// kernel: tpu_custom_call.1
$region0: #{tpu_custom_call.1}
  #allocation0 [shape = 'u32[]', space=smem, size = 0x4, offset = 0x4, fixed_abs, tag = 'smem constant byte address 0x4 - core index']
  #allocation1 [shape = 'u32[144,128]{1,0:T(1,128)}', space=vmem, size = 0x12000, scoped, tag = 'internal scratch']
  #allocation2 [shape = 'f32[2,32]{1,0:T(2,128)}', space=vmem, size = 0x400, scoped, tag = 'scratch operand']
  %s0 = inlined_call_operand.hbm [shape: f32[2,8], index: 0, kind: input, shape index: {}]
  %s1 = inlined_call_operand.hbm [shape: f32[2,8,32], index: 1, kind: input, shape index: {}]
  %s2 = inlined_call_operand.hbm [shape: f32[2,32], index: 2, kind: output, shape index: {}]
  %s3 = sld [smem:[#allocation0]]
  $region34: #{tpu_custom_call.1} parent=0
    _
  %s5 = ssub.s32 1, %s3
  %s6 = scalar_select 0, %s5, %s3
  $region1: #{tpu_custom_call.1} parent=0
    #allocation3 [shape = 'u8[1024]{0}', space=vmem, size = 0x400, scoped, tag = 'input window, operand 0, single buffered']
    #allocation4 [shape = 's32[1]{0}', space=sflag, size = 0x4, scoped, tag = 'scoped memory for tpu_custom_call.1']
    #allocation5 [shape = 's32[1]{0}', space=sflag, size = 0x4, scoped, tag = 'scoped memory for tpu_custom_call.1']
    #allocation6 [shape = 'u8[8192]{0}', space=vmem, size = 0x2000, scoped, tag = 'input window, operand 1, single buffered']
    #allocation7 [shape = 's32[1]{0}', space=sflag, size = 0x4, scoped, tag = 'scoped memory for tpu_custom_call.1']
    #allocation8 [shape = 'u8[1024]{0}', space=vmem, size = 0x400, scoped, tag = 'output window, operand 0, single buffered']
    %7 = vsyncpa [#allocation4], 0
    %8 = vsyncpa [#allocation7], 0
    %9 = vsyncpa [#allocation5], 0
    // Predicated region
    $region2: #{tpu_custom_call.1} parent=1 // pred_check
      _
    $region3: #{tpu_custom_call.1} parent=1 // pred_check_branch
      %11 = sbr.rel (0) target = $region5
    $region4: #{tpu_custom_call.1} parent=1 // pred_region
      %s13 = ssub.s32 32, 32
      %14 = vsyncadd [#allocation4], %s13
      %s16 = sshll.u32 [#allocation3], 4
      %s17 = int_to_ptr.vmem [resolvable:$true] %s16
      %19 = dma.hbm_to_vmem [thread:$0]  %s0, 32, %s17, [#allocation4]
    $region5: #{tpu_custom_call.1} parent=1 // pred_fallthru
      _
    // Predicated region
    $region6: #{tpu_custom_call.1} parent=1 // pred_check
      _
    $region7: #{tpu_custom_call.1} parent=1 // pred_check_branch
      %21 = sbr.rel (0) target = $region9
    $region8: #{tpu_custom_call.1} parent=1 // pred_region
      %s23 = ssub.s32 256, 256
      %24 = vsyncadd [#allocation7], %s23
      %s25 = sshll.u32 [#allocation6], 4
      %s26 = int_to_ptr.vmem [resolvable:$true] %s25
      %31 = dma.hbm_to_vmem [thread:$0]  %s1, 256, %s26, [#allocation7], 128, 128, 8
    $region9: #{tpu_custom_call.1} parent=1 // pred_fallthru
      _
    // Predicated region
    $region10: #{tpu_custom_call.1} parent=1 // pred_check
      _
    $region11: #{tpu_custom_call.1} parent=1 // pred_check_branch
      %33 = sbr.rel (0) target = $region13
    $region12: #{tpu_custom_call.1} parent=1 // pred_region
      %34 = dma.done [#allocation4], 32
    $region13: #{tpu_custom_call.1} parent=1 // pred_fallthru
      _
    // Predicated region
    $region14: #{tpu_custom_call.1} parent=1 // pred_check
      _
    $region15: #{tpu_custom_call.1} parent=1 // pred_check_branch
      %36 = sbr.rel (0) target = $region17
    $region16: #{tpu_custom_call.1} parent=1 // pred_region
      %37 = dma.done [#allocation7], 256
    $region17: #{tpu_custom_call.1} parent=1 // pred_fallthru
      _
    %p38 = scmp.eq.s32.totalorder 0, 0
    // Predicated region
    $region18: #{tpu_custom_call.1} parent=1 // pred_check
      %p39 = pneg %p38
    $region19: #{tpu_custom_call.1} parent=1 // pred_check_branch
      %41 = sbr.rel (%p39) target = $region21
    $region20: #{tpu_custom_call.1} parent=1 // pred_region
      %vm42 = vcmask 254976
      %43 = vst.msk [vmem:[#allocation2] sm:$0x3] %vm42, 0.0
    $region21: #{tpu_custom_call.1} parent=1 // pred_fallthru
      _
    %v44 = vld [vmem:[#allocation3] sm:$0x3]
    %v45 = vld [vmem:[#allocation6] sm:$0xff]
    %v46 = vld [vmem:[#allocation6 + $0x8] sm:$0xff]
    %v47 = vld [vmem:[#allocation2] sm:$0x3]
    %v48 = vlaneseq
    %v49 = vshrl.u32 %v48, 7
    %v50 = vsub.s32 0, %v49
    %v51 = vrot.slane %v44, %v50
    %53 = vbcast.lane.b32.xlu0 %v51, 256
    %v54 = vpop.permute.xlu0 %53
    %v55 = vlaneseq
    %v56 = vshrl.u32 %v55, 7
    %v57 = vsub.s32 1, %v56
    %v58 = vrot.slane %v44, %v57
    %60 = vbcast.lane.b32.xlu0 %v58, 256
    %v61 = vpop.permute.xlu0 %60
    %v62 = vmul.f32 %v45, %v54
    %v63 = vmul.f32 %v46, %v61
    %vm64 = vcmask 261120
    %v65 = vsel %vm64, %v62, 0.0
    %v66 = vrot.slane %v65, 4
    %v67 = vadd.f32 %v65, %v66
    %v68 = vrot.slane %v67, 2
    %v69 = vadd.f32 %v67, %v68
    %v70 = vrot.slane %v69, 1
    %v71 = vadd.f32 %v69, %v70
    %v72 = vsel %vm64, %v63, 0.0
    %v73 = vrot.slane %v72, 4
    %v74 = vadd.f32 %v72, %v73
    %v75 = vrot.slane %v74, 2
    %v76 = vadd.f32 %v74, %v75
    %v77 = vrot.slane %v76, 1
    %v78 = vadd.f32 %v76, %v77
    %vm81 = vcmask 1041409
    %v82 = vsel %vm81, %v78, %v71
    %v84 = vadd.f32 %v47, %v82
    %vm85 = vcmask 254976
    %86 = vst.msk [vmem:[#allocation2] sm:$0x3] %vm85, %v84
    // Predicated region
    $region22: #{tpu_custom_call.1} parent=1 // pred_check
      %p87 = pneg %p38
    $region23: #{tpu_custom_call.1} parent=1 // pred_check_branch
      %89 = sbr.rel (%p87) target = $region25
    $region24: #{tpu_custom_call.1} parent=1 // pred_region
      %v90 = vld [vmem:[#allocation2] sm:$0x3]
      %91 = vst.msk [vmem:[#allocation8] sm:$0x3] %vm85, %v90
    $region25: #{tpu_custom_call.1} parent=1 // pred_fallthru
      _
    // Predicated region
    $region26: #{tpu_custom_call.1} parent=1 // pred_check
      _
    $region27: #{tpu_custom_call.1} parent=1 // pred_check_branch
      %93 = sbr.rel (0) target = $region29
    $region28: #{tpu_custom_call.1} parent=1 // pred_region
      %s95 = ssub.s32 32, 32
      %96 = vsyncadd [#allocation5], %s95
      %s98 = sshll.u32 [#allocation8], 4
      %s99 = int_to_ptr.vmem [resolvable:$true] %s98
      %101 = dma.vmem_to_hbm [thread:$0]  %s99, 32, %s2, [#allocation5]
    $region29: #{tpu_custom_call.1} parent=1 // pred_fallthru
      _
    // Predicated region
    $region30: #{tpu_custom_call.1} parent=1 // pred_check
      _
    $region31: #{tpu_custom_call.1} parent=1 // pred_check_branch
      %103 = sbr.rel (0) target = $region33
    $region32: #{tpu_custom_call.1} parent=1 // pred_region
      %104 = dma.done [#allocation5], 32
    $region33: #{tpu_custom_call.1} parent=1 // pred_fallthru
      _
    %105 = vsyncpa [#allocation4], 1
    %106 = vsyncpa [#allocation7], 1
    %107 = vsyncpa [#allocation5], 1

</llo_original>
